<compile_context>
chip_gen: v7x
topology: tpu7x:2x2x1
jax: 0.10.0
libtpu: 0.0.40
codegen_flags: <defaults>
</compile_context>

<pallas_src>
import math

import jax
import jax.numpy as jnp
from jax import lax
from jax.experimental import pallas as pl
from jax.experimental.pallas import tpu as pltpu

LANES = 128  # lane width; batch N must be a multiple of this


# --------------------------------------------------------------------------
# Kernels
# --------------------------------------------------------------------------
def env_step_kernel(iparams_ref, fparams_ref, gauss_v_ref, gauss_w_ref,
                    x_ref, a_ref, tgt_ref,
                    next_ref, dist_ref, reached_ref):
    """One env step on a (fields, block_rows, 128) tile."""
    # scalar parameters (SMEM, scalar-prefetched)
    DT = fparams_ref[0]
    g0 = fparams_ref[1]
    g1 = fparams_ref[2]
    goal_radius = fparams_ref[3]

    t = iparams_ref[0]
    pert_start = iparams_ref[1]
    pert_len = iparams_ref[2]
    use_pert = iparams_ref[3]

    # lane-dense (block_rows, 128) field tiles
    px = x_ref[0]
    py = x_ref[1]
    th = x_ref[2]
    lv = x_ref[3]
    av = x_ref[4]
    a0 = a_ref[0]
    a1 = a_ref[1]
    tx = tgt_ref[0]
    ty = tgt_ref[1]

    # relative distance / reach test (reached from squared distance)
    dx = px - tx
    dy = py - ty
    d2 = dx * dx + dy * dy
    dist_ref[...] = jnp.sqrt(d2)
    reached_ref[...] = (d2 < goal_radius * goal_radius).astype(jnp.int32)

    # perturbation lookup: scalar SMEM gather guarded by window test
    idx = t - pert_start
    in_range = jnp.logical_and(
        use_pert == 1, jnp.logical_and(idx >= 0, idx < pert_len))
    safe_idx = jnp.clip(idx, 0, pert_len - 1)
    vt = jnp.where(in_range, gauss_v_ref[safe_idx], jnp.float32(0.0))
    wt = jnp.where(in_range, gauss_w_ref[safe_idx], jnp.float32(0.0))

    # dynamics (eta == 0, noise-free branch)
    next_ref[0] = px + lv * jnp.cos(th) * DT
    next_ref[1] = py + lv * jnp.sin(th) * DT
    next_ref[2] = th + av * DT
    next_ref[3] = g0 * a0 + vt
    next_ref[4] = g1 * a1 + wt


def make_rollout_kernel(num_steps):
    """Fused multi-step rollout: state stays resident across `num_steps` steps."""

    def env_rollout_kernel(iparams_ref, fparams_ref, gauss_v_ref, gauss_w_ref,
                           x_ref, a_ref, tgt_ref,
                           final_ref, dist_ref, reached_ref):
        DT = fparams_ref[0]
        g0 = fparams_ref[1]
        g1 = fparams_ref[2]
        goal_radius = fparams_ref[3]

        t0 = iparams_ref[0]
        pert_start = iparams_ref[1]
        pert_len = iparams_ref[2]
        use_pert = iparams_ref[3]

        a0 = a_ref[0]
        a1 = a_ref[1]
        tx = tgt_ref[0]
        ty = tgt_ref[1]
        ga0 = g0 * a0      # constant across steps (action fixed per rollout)
        ga1 = g1 * a1

        def body(step, carry):
            px, py, th, lv, av = carry
            tt = t0 + step
            idx = tt - pert_start
            in_range = jnp.logical_and(
                use_pert == 1, jnp.logical_and(idx >= 0, idx < pert_len))
            safe_idx = jnp.clip(idx, 0, pert_len - 1)
            vt = jnp.where(in_range, gauss_v_ref[safe_idx], jnp.float32(0.0))
            wt = jnp.where(in_range, gauss_w_ref[safe_idx], jnp.float32(0.0))
            npx = px + lv * jnp.cos(th) * DT
            npy = py + lv * jnp.sin(th) * DT
            nth = th + av * DT
            nlv = ga0 + vt
            nav = ga1 + wt
            return (npx, npy, nth, nlv, nav)

        carry0 = (x_ref[0], x_ref[1], x_ref[2], x_ref[3], x_ref[4])
        px, py, th, lv, av = lax.fori_loop(0, num_steps, body, carry0)

        final_ref[0] = px
        final_ref[1] = py
        final_ref[2] = th
        final_ref[3] = lv
        final_ref[4] = av

        dx = px - tx
        dy = py - ty
        d2 = dx * dx + dy * dy
        dist_ref[...] = jnp.sqrt(d2)
        reached_ref[...] = (d2 < goal_radius * goal_radius).astype(jnp.int32)

    return env_rollout_kernel


# --------------------------------------------------------------------------
# Wrappers
# --------------------------------------------------------------------------
def _pack_params(params, t):
    """Build SMEM scalar-prefetch operands; t / flags stay traceable."""
    fparams = jnp.stack([
        jnp.asarray(params["DT"], jnp.float32),
        params["pro_gains"][0].astype(jnp.float32),
        params["pro_gains"][1].astype(jnp.float32),
        params["goal_radius"].reshape(-1)[0].astype(jnp.float32),
    ])
    gauss_v = params["gaussian_v_array"].astype(jnp.float32)
    gauss_w = params["gaussian_w_array"].astype(jnp.float32)
    pert_len = gauss_v.shape[0]
    iparams = jnp.stack([
        jnp.asarray(t, jnp.int32),
        jnp.asarray(params["perturbation_start_t"], jnp.int32),
        jnp.asarray(pert_len, jnp.int32),
        jnp.asarray(params["use_perturbation"], jnp.int32),
    ])
    return iparams, fparams, gauss_v, gauss_w


def _pick_block_rows(R, max_rows=256):
    """Rows of 128 lanes per block: large blocks, but keep grid >= 2 (v7x TCs)."""
    if R < 16:
        return R                       # one full-extent block (always legal)
    cap = min(max_rows, R // 2)        # leave >= 2 grid steps for megacore
    for br in range(cap, 7, -1):
        if R % br == 0 and br % 8 == 0:
            return br
    return R                           # fallback: one full block


def _env_pallas_call(kernel, x, a, target, t, params, *, max_block_rows=256):
    """Shared driver: (5,N)/(2,N)/(2,N) -> Pallas call on (fields, R, 128) tiles."""
    N = x.shape[1]
    assert N % LANES == 0, "batch size must be a multiple of 128"
    R = N // LANES
    br = _pick_block_rows(R, max_block_rows)

    iparams, fparams, gauss_v, gauss_w = _pack_params(params, t)

    x3 = x.astype(jnp.float32).reshape(5, R, LANES)
    a3 = a.astype(jnp.float32).reshape(2, R, LANES)
    t3 = target.astype(jnp.float32).reshape(2, R, LANES)

    next3, dist2, reached2 = pl.pallas_call(
        kernel,
        out_shape=(
            jax.ShapeDtypeStruct((5, R, LANES), jnp.float32),
            jax.ShapeDtypeStruct((R, LANES), jnp.float32),
            jax.ShapeDtypeStruct((R, LANES), jnp.int32),
        ),
        grid_spec=pltpu.PrefetchScalarGridSpec(
            num_scalar_prefetch=4,
            grid=(R // br,),
            in_specs=[
                pl.BlockSpec((5, br, LANES), lambda i, *_: (0, i, 0)),
                pl.BlockSpec((2, br, LANES), lambda i, *_: (0, i, 0)),
                pl.BlockSpec((2, br, LANES), lambda i, *_: (0, i, 0)),
            ],
            out_specs=[
                pl.BlockSpec((5, br, LANES), lambda i, *_: (0, i, 0)),
                pl.BlockSpec((br, LANES), lambda i, *_: (i, 0)),
                pl.BlockSpec((br, LANES), lambda i, *_: (i, 0)),
            ],
        ),
        compiler_params=pltpu.CompilerParams(
            dimension_semantics=("parallel",)),  # v7x: split batch over 2 TCs
    )(iparams, fparams, gauss_v, gauss_w, x3, a3, t3)

    return (next3.reshape(5, N),
            dist2.reshape(N),
            reached2.reshape(N) != 0)


def env_forward_batched(x, a, target, t, params, *, max_block_rows=256):
    """Batched Env.forward: x (5,N), a (2,N), target (2,N), N % 128 == 0.

    Returns (next_x (5,N) f32, reached (N,) bool, relative_dist (N,) f32)."""
    nx, dist, reached = _env_pallas_call(env_step_kernel, x, a, target, t,
                                         params, max_block_rows=max_block_rows)
    return nx, reached, dist


def env_rollout_batched(x, a, target, t0, num_steps, params, *,
                        max_block_rows=256):
    """Fused rollout of `num_steps` env steps (constant action/target).

    Returns (final_x (5,N), reached (N,) bool, dist (N,)) where reached/dist
    are evaluated on the final state."""
    kernel = make_rollout_kernel(int(num_steps))
    fx, dist, reached = _env_pallas_call(kernel, x, a, target, t0, params,
                                         max_block_rows=max_block_rows)
    return fx, reached, dist


# --------------------------------------------------------------------------
# Single-env path (plain JAX: a Pallas launch is pure overhead here)
# --------------------------------------------------------------------------
def _perturbation_at(t, params):
    gv = jnp.asarray(params["gaussian_v_array"], jnp.float32)
    gw = jnp.asarray(params["gaussian_w_array"], jnp.float32)
    L = gv.shape[0]
    idx = jnp.asarray(t, jnp.int32) - jnp.asarray(
        params["perturbation_start_t"], jnp.int32)
    in_range = jnp.logical_and(
        jnp.asarray(params["use_perturbation"], bool),
        jnp.logical_and(idx >= 0, idx < L))
    safe = jnp.clip(idx, 0, L - 1)
    return (jnp.where(in_range, gv[safe], 0.0),
            jnp.where(in_range, gw[safe], 0.0))


def env_forward(x, a, t, params):
    """Single-env Env.forward (module semantics). Returns (next_x (5,1), reached (1,), dist)."""
    xf = jnp.asarray(x, jnp.float32).reshape(-1)
    af = jnp.asarray(a, jnp.float32).reshape(-1)
    tgt = jnp.asarray(params["target_position"], jnp.float32).reshape(-1)
    px, py, th, lv, av = xf[0], xf[1], xf[2], xf[3], xf[4]
    dist = jnp.sqrt((px - tgt[0]) ** 2 + (py - tgt[1]) ** 2)
    reached = (dist < params["goal_radius"].reshape(-1)[0]).reshape(1)
    vt, wt = _perturbation_at(t, params)
    DT = params["DT"]
    g = params["pro_gains"]
    next_x = jnp.stack([px + lv * jnp.cos(th) * DT,
                        py + lv * jnp.sin(th) * DT,
                        th + av * DT,
                        g[0] * af[0] + vt,
                        g[1] * af[1] + wt]).reshape(5, 1)
    return next_x, reached, dist


# --------------------------------------------------------------------------
# Pure-JAX references + synthetic params (deterministic replacement for reset())
# --------------------------------------------------------------------------
def make_params():
    key = jax.random.PRNGKey(0)
    k_tgt, _ = jax.random.split(key)
    target_position = jax.random.normal(k_tgt, (2, 1), jnp.float32) * 0.5

    duration = 8
    sigma = 2.0
    pert_vel = jnp.array([0.2, 0.1], jnp.float32)
    xs = jnp.arange(duration + 1, dtype=jnp.float32)
    mu = duration / 2.0
    gaussian_identity = jnp.exp(-0.5 * ((xs - mu) / sigma) ** 2)

    return dict(
        DT=0.1,
        pro_gains=jnp.array([0.4, 1.57], jnp.float32),
        goal_radius=jnp.array([0.26], jnp.float32),
        target_position=target_position,
        perturbation_start_t=3,
        use_perturbation=True,
        gaussian_v_array=gaussian_identity * pert_vel[0],
        gaussian_w_array=gaussian_identity * pert_vel[1],
    )


def ref_forward_batched(x, a, tgt, t, p):
    px, py, th, lv, av = x[0], x[1], x[2], x[3], x[4]
    dist = jnp.sqrt((px - tgt[0]) ** 2 + (py - tgt[1]) ** 2)
    reached = dist < p["goal_radius"][0]
    vt, wt = _perturbation_at(t, p)
    DT = p["DT"]
    g = p["pro_gains"]
    next_x = jnp.stack([px + lv * jnp.cos(th) * DT,
                        py + lv * jnp.sin(th) * DT,
                        th + av * DT,
                        g[0] * a[0] + vt,
                        g[1] * a[1] + wt], axis=0)
    return next_x, reached, dist


def _reached_match(reached, reached_ref, dist_ref, radius, tol=1e-4):
    """Compare reach flags, ignoring envs numerically on the radius boundary."""
    away = jnp.abs(dist_ref - radius) > tol
    return bool(jnp.all(jnp.logical_or(~away, reached == reached_ref)))


# --------------------------------------------------------------------------
# Demo / checks
# --------------------------------------------------------------------------
if __name__ == "__main__":
    key = jax.random.PRNGKey(0)
    k1, k2, k3, k4 = jax.random.split(key, 4)
    params = make_params()
    radius = params["goal_radius"][0]

    # ---- single env: plain JAX (per perf review, no Pallas launch) ----
    x1 = jnp.array([0.0, 0.0, math.pi / 2, 0.0, 0.0], jnp.float32).reshape(5, 1) \
        + jax.random.normal(k1, (5, 1), jnp.float32) * 0.3
    a1 = jax.random.uniform(k2, (2,), jnp.float32, minval=-1.0, maxval=1.0)
    nx1, r1, d1 = env_forward(x1, a1, 5, params)
    jax.block_until_ready((nx1, r1, d1))
    assert nx1.shape == (5, 1) and r1.shape == (1,)

    # ---- batched single step (Pallas): N=2048 -> R=16, 2 blocks of (·,8,128) ----
    N = 2048
    xb = jax.random.normal(k3, (5, N), jnp.float32) * 0.5
    ab = jax.random.uniform(k4, (2, N), jnp.float32, minval=-1.0, maxval=1.0)
    tgtb = jnp.broadcast_to(params["target_position"].reshape(2, 1), (2, N))
    t = 5  # inside the perturbation window [3, 3 + 9)

    nb, rb, db = env_forward_batched(xb, ab, tgtb, t, params)
    jax.block_until_ready((nb, rb, db))
    nb_ref, rb_ref, db_ref = ref_forward_batched(xb, ab, tgtb, t, params)
    assert nb.shape == (5, N) and rb.dtype == jnp.bool_
    assert jnp.allclose(nb, nb_ref, atol=1e-5, rtol=1e-5)
    assert jnp.allclose(db, db_ref, atol=1e-5, rtol=1e-5)
    assert _reached_match(rb, rb_ref, db_ref, radius)

    # ---- small-N path: N=256 -> single full-extent block ----
    Ns = 256
    xs = jax.random.normal(k1, (5, Ns), jnp.float32) * 0.5
    asb = jax.random.uniform(k2, (2, Ns), jnp.float32, minval=-1.0, maxval=1.0)
    tgts = jnp.broadcast_to(params["target_position"].reshape(2, 1), (2, Ns))
    ns_, rs_, ds_ = env_forward_batched(xs, asb, tgts, 0, params)
    jax.block_until_ready((ns_, rs_, ds_))
    ns_ref, rs_ref, ds_ref = ref_forward_batched(xs, asb, tgts, 0, params)
    assert jnp.allclose(ns_, ns_ref, atol=1e-5, rtol=1e-5)
    assert jnp.allclose(ds_, ds_ref, atol=1e-5, rtol=1e-5)
    assert _reached_match(rs_, rs_ref, ds_ref, radius)

    # ---- fused rollout: 12 steps, state resident in VMEM, single launch ----
    num_steps = 12
    xT, rT, dT = env_rollout_batched(xb, ab, tgtb, 0, num_steps, params)
    jax.block_until_ready((xT, rT, dT))

    x_ref = xb
    for tt in range(num_steps):
        x_ref, _, _ = ref_forward_batched(x_ref, ab, tgtb, tt, params)
    d_ref = jnp.sqrt((x_ref[0] - tgtb[0]) ** 2 + (x_ref[1] - tgtb[1]) ** 2)
    r_ref = d_ref < radius
    assert jnp.allclose(xT, x_ref, atol=1e-4, rtol=1e-4)
    assert jnp.allclose(dT, d_ref, atol=1e-4, rtol=1e-4)
    assert _reached_match(rT, r_ref, d_ref, radius)

    print("KERNEL_OK")
</pallas_src>

<mosaic_0001>
module attributes {stable_mosaic.version = 11 : i64} {
  func.func @env_step_kernel(%arg0: i32, %arg1: memref<4xi32, #tpu.memory_space<smem>>, %arg2: memref<4xf32, #tpu.memory_space<smem>>, %arg3: memref<9xf32, #tpu.memory_space<smem>>, %arg4: memref<9xf32, #tpu.memory_space<smem>>, %arg5: memref<5x8x128xf32, #tpu.memory_space<vmem>>, %arg6: memref<2x8x128xf32, #tpu.memory_space<vmem>>, %arg7: memref<2x8x128xf32, #tpu.memory_space<vmem>>, %arg8: memref<5x8x128xf32, #tpu.memory_space<vmem>>, %arg9: memref<8x128xf32, #tpu.memory_space<vmem>>, %arg10: memref<8x128xi32, #tpu.memory_space<vmem>>) attributes {dimension_semantics = [#tpu.dimension_semantics<parallel>], iteration_bounds = array<i64: 2>, scalar_prefetch = 4 : i64, scratch_operands = 0 : i64, tpu.core_type = #tpu.core_type<tc>, window_params = [{transform_indices = @transform_0, window_bounds = array<i64: 5, 8, 128>}, {transform_indices = @transform_1, window_bounds = array<i64: 2, 8, 128>}, {transform_indices = @transform_2, window_bounds = array<i64: 2, 8, 128>}, {transform_indices = @transform_3, window_bounds = array<i64: 5, 8, 128>}, {transform_indices = @transform_4, window_bounds = array<i64: 8, 128>}, {transform_indices = @transform_5, window_bounds = array<i64: 8, 128>}]} {
    %c0 = arith.constant 0 : index
    %0 = memref.load %arg2[%c0] : memref<4xf32, #tpu.memory_space<smem>>
    %c1 = arith.constant 1 : index
    %1 = memref.load %arg2[%c1] : memref<4xf32, #tpu.memory_space<smem>>
    %c2 = arith.constant 2 : index
    %2 = memref.load %arg2[%c2] : memref<4xf32, #tpu.memory_space<smem>>
    %c3 = arith.constant 3 : index
    %3 = memref.load %arg2[%c3] : memref<4xf32, #tpu.memory_space<smem>>
    %c0_0 = arith.constant 0 : index
    %4 = memref.load %arg1[%c0_0] : memref<4xi32, #tpu.memory_space<smem>>
    %c1_1 = arith.constant 1 : index
    %5 = memref.load %arg1[%c1_1] : memref<4xi32, #tpu.memory_space<smem>>
    %c2_2 = arith.constant 2 : index
    %6 = memref.load %arg1[%c2_2] : memref<4xi32, #tpu.memory_space<smem>>
    %c3_3 = arith.constant 3 : index
    %7 = memref.load %arg1[%c3_3] : memref<4xi32, #tpu.memory_space<smem>>
    %c0_4 = arith.constant 0 : index
    %c0_5 = arith.constant 0 : index
    %c0_6 = arith.constant 0 : index
    %8 = vector.load %arg5[%c0_4, %c0_5, %c0_6] : memref<5x8x128xf32, #tpu.memory_space<vmem>>, vector<1x8x128xf32>
    %9 = vector.shape_cast %8 : vector<1x8x128xf32> to vector<8x128xf32>
    %c1_7 = arith.constant 1 : index
    %c0_8 = arith.constant 0 : index
    %c0_9 = arith.constant 0 : index
    %10 = vector.load %arg5[%c1_7, %c0_8, %c0_9] : memref<5x8x128xf32, #tpu.memory_space<vmem>>, vector<1x8x128xf32>
    %11 = vector.shape_cast %10 : vector<1x8x128xf32> to vector<8x128xf32>
    %c2_10 = arith.constant 2 : index
    %c0_11 = arith.constant 0 : index
    %c0_12 = arith.constant 0 : index
    %12 = vector.load %arg5[%c2_10, %c0_11, %c0_12] : memref<5x8x128xf32, #tpu.memory_space<vmem>>, vector<1x8x128xf32>
    %13 = vector.shape_cast %12 : vector<1x8x128xf32> to vector<8x128xf32>
    %c3_13 = arith.constant 3 : index
    %c0_14 = arith.constant 0 : index
    %c0_15 = arith.constant 0 : index
    %14 = vector.load %arg5[%c3_13, %c0_14, %c0_15] : memref<5x8x128xf32, #tpu.memory_space<vmem>>, vector<1x8x128xf32>
    %15 = vector.shape_cast %14 : vector<1x8x128xf32> to vector<8x128xf32>
    %c4 = arith.constant 4 : index
    %c0_16 = arith.constant 0 : index
    %c0_17 = arith.constant 0 : index
    %16 = vector.load %arg5[%c4, %c0_16, %c0_17] : memref<5x8x128xf32, #tpu.memory_space<vmem>>, vector<1x8x128xf32>
    %17 = vector.shape_cast %16 : vector<1x8x128xf32> to vector<8x128xf32>
    %c0_18 = arith.constant 0 : index
    %c0_19 = arith.constant 0 : index
    %c0_20 = arith.constant 0 : index
    %18 = vector.load %arg6[%c0_18, %c0_19, %c0_20] : memref<2x8x128xf32, #tpu.memory_space<vmem>>, vector<1x8x128xf32>
    %19 = vector.shape_cast %18 : vector<1x8x128xf32> to vector<8x128xf32>
    %c1_21 = arith.constant 1 : index
    %c0_22 = arith.constant 0 : index
    %c0_23 = arith.constant 0 : index
    %20 = vector.load %arg6[%c1_21, %c0_22, %c0_23] : memref<2x8x128xf32, #tpu.memory_space<vmem>>, vector<1x8x128xf32>
    %21 = vector.shape_cast %20 : vector<1x8x128xf32> to vector<8x128xf32>
    %c0_24 = arith.constant 0 : index
    %c0_25 = arith.constant 0 : index
    %c0_26 = arith.constant 0 : index
    %22 = vector.load %arg7[%c0_24, %c0_25, %c0_26] : memref<2x8x128xf32, #tpu.memory_space<vmem>>, vector<1x8x128xf32>
    %23 = vector.shape_cast %22 : vector<1x8x128xf32> to vector<8x128xf32>
    %c1_27 = arith.constant 1 : index
    %c0_28 = arith.constant 0 : index
    %c0_29 = arith.constant 0 : index
    %24 = vector.load %arg7[%c1_27, %c0_28, %c0_29] : memref<2x8x128xf32, #tpu.memory_space<vmem>>, vector<1x8x128xf32>
    %25 = vector.shape_cast %24 : vector<1x8x128xf32> to vector<8x128xf32>
    %26 = arith.subf %9, %23 : vector<8x128xf32>
    %27 = arith.subf %11, %25 : vector<8x128xf32>
    %28 = arith.mulf %26, %26 : vector<8x128xf32>
    %29 = arith.mulf %27, %27 : vector<8x128xf32>
    %30 = arith.addf %28, %29 : vector<8x128xf32>
    %31 = math.sqrt %30 : vector<8x128xf32>
    %c0_30 = arith.constant 0 : index
    %c0_31 = arith.constant 0 : index
    %32 = vector.load %arg9[%c0_30, %c0_31] : memref<8x128xf32, #tpu.memory_space<vmem>>, vector<8x128xf32>
    tpu.vector_store %arg9[%c0_30, %c0_31], %31 {strides = array<i32>} : memref<8x128xf32, #tpu.memory_space<vmem>>, vector<8x128xf32>,
    %33 = arith.mulf %3, %3 : f32
    %34 = vector.broadcast %33 : f32 to vector<8x128xf32>
    %35 = arith.cmpf olt, %30, %34 : vector<8x128xf32>
    %36 = arith.extui %35 : vector<8x128xi1> to vector<8x128xi32>
    %c0_32 = arith.constant 0 : index
    %c0_33 = arith.constant 0 : index
    %37 = vector.load %arg10[%c0_32, %c0_33] : memref<8x128xi32, #tpu.memory_space<vmem>>, vector<8x128xi32>
    tpu.vector_store %arg10[%c0_32, %c0_33], %36 {strides = array<i32>} : memref<8x128xi32, #tpu.memory_space<vmem>>, vector<8x128xi32>,
    %38 = arith.subi %4, %5 : i32
    %c1_i32 = arith.constant 1 : i32
    %39 = arith.cmpi eq, %7, %c1_i32 : i32
    %c0_i32 = arith.constant 0 : i32
    %40 = arith.cmpi sge, %38, %c0_i32 : i32
    %41 = arith.cmpi slt, %38, %6 : i32
    %42 = arith.andi %40, %41 : i1
    %43 = arith.andi %39, %42 : i1
    %c1_i32_34 = arith.constant 1 : i32
    %44 = arith.subi %6, %c1_i32_34 : i32
    %c0_i32_35 = arith.constant 0 : i32
    %45 = arith.maxsi %c0_i32_35, %38 : i32
    %46 = arith.minsi %44, %45 : i32
    %47 = arith.index_cast %46 : i32 to index
    %48 = memref.load %arg3[%47] : memref<9xf32, #tpu.memory_space<smem>>
    %cst = arith.constant 0.000000e+00 : f32
    %49 = arith.select %43, %48, %cst : f32
    %50 = arith.index_cast %46 : i32 to index
    %51 = memref.load %arg4[%50] : memref<9xf32, #tpu.memory_space<smem>>
    %cst_36 = arith.constant 0.000000e+00 : f32
    %52 = arith.select %43, %51, %cst_36 : f32
    %53 = math.cos %13 : vector<8x128xf32>
    %54 = arith.mulf %15, %53 : vector<8x128xf32>
    %55 = vector.broadcast %0 : f32 to vector<8x128xf32>
    %56 = arith.mulf %54, %55 : vector<8x128xf32>
    %57 = arith.addf %9, %56 : vector<8x128xf32>
    %c0_37 = arith.constant 0 : index
    %c0_38 = arith.constant 0 : index
    %c0_39 = arith.constant 0 : index
    %58 = vector.load %arg8[%c0_37, %c0_38, %c0_39] : memref<5x8x128xf32, #tpu.memory_space<vmem>>, vector<1x8x128xf32>
    %59 = vector.shape_cast %58 : vector<1x8x128xf32> to vector<8x128xf32>
    %60 = vector.shape_cast %57 : vector<8x128xf32> to vector<1x8x128xf32>
    tpu.vector_store %arg8[%c0_37, %c0_38, %c0_39], %60 {strides = array<i32>} : memref<5x8x128xf32, #tpu.memory_space<vmem>>, vector<1x8x128xf32>,
    %61 = math.sin %13 : vector<8x128xf32>
    %62 = arith.mulf %15, %61 : vector<8x128xf32>
    %63 = vector.broadcast %0 : f32 to vector<8x128xf32>
    %64 = arith.mulf %62, %63 : vector<8x128xf32>
    %65 = arith.addf %11, %64 : vector<8x128xf32>
    %c1_40 = arith.constant 1 : index
    %c0_41 = arith.constant 0 : index
    %c0_42 = arith.constant 0 : index
    %66 = vector.load %arg8[%c1_40, %c0_41, %c0_42] : memref<5x8x128xf32, #tpu.memory_space<vmem>>, vector<1x8x128xf32>
    %67 = vector.shape_cast %66 : vector<1x8x128xf32> to vector<8x128xf32>
    %68 = vector.shape_cast %65 : vector<8x128xf32> to vector<1x8x128xf32>
    tpu.vector_store %arg8[%c1_40, %c0_41, %c0_42], %68 {strides = array<i32>} : memref<5x8x128xf32, #tpu.memory_space<vmem>>, vector<1x8x128xf32>,
    %69 = vector.broadcast %0 : f32 to vector<8x128xf32>
    %70 = arith.mulf %17, %69 : vector<8x128xf32>
    %71 = arith.addf %13, %70 : vector<8x128xf32>
    %c2_43 = arith.constant 2 : index
    %c0_44 = arith.constant 0 : index
    %c0_45 = arith.constant 0 : index
    %72 = vector.load %arg8[%c2_43, %c0_44, %c0_45] : memref<5x8x128xf32, #tpu.memory_space<vmem>>, vector<1x8x128xf32>
    %73 = vector.shape_cast %72 : vector<1x8x128xf32> to vector<8x128xf32>
    %74 = vector.shape_cast %71 : vector<8x128xf32> to vector<1x8x128xf32>
    tpu.vector_store %arg8[%c2_43, %c0_44, %c0_45], %74 {strides = array<i32>} : memref<5x8x128xf32, #tpu.memory_space<vmem>>, vector<1x8x128xf32>,
    %75 = vector.broadcast %1 : f32 to vector<8x128xf32>
    %76 = arith.mulf %75, %19 : vector<8x128xf32>
    %77 = vector.broadcast %49 : f32 to vector<8x128xf32>
    %78 = arith.addf %76, %77 : vector<8x128xf32>
    %c3_46 = arith.constant 3 : index
    %c0_47 = arith.constant 0 : index
    %c0_48 = arith.constant 0 : index
    %79 = vector.load %arg8[%c3_46, %c0_47, %c0_48] : memref<5x8x128xf32, #tpu.memory_space<vmem>>, vector<1x8x128xf32>
    %80 = vector.shape_cast %79 : vector<1x8x128xf32> to vector<8x128xf32>
    %81 = vector.shape_cast %78 : vector<8x128xf32> to vector<1x8x128xf32>
    tpu.vector_store %arg8[%c3_46, %c0_47, %c0_48], %81 {strides = array<i32>} : memref<5x8x128xf32, #tpu.memory_space<vmem>>, vector<1x8x128xf32>,
    %82 = vector.broadcast %2 : f32 to vector<8x128xf32>
    %83 = arith.mulf %82, %21 : vector<8x128xf32>
    %84 = vector.broadcast %52 : f32 to vector<8x128xf32>
    %85 = arith.addf %83, %84 : vector<8x128xf32>
    %c4_49 = arith.constant 4 : index
    %c0_50 = arith.constant 0 : index
    %c0_51 = arith.constant 0 : index
    %86 = vector.load %arg8[%c4_49, %c0_50, %c0_51] : memref<5x8x128xf32, #tpu.memory_space<vmem>>, vector<1x8x128xf32>
    %87 = vector.shape_cast %86 : vector<1x8x128xf32> to vector<8x128xf32>
    %88 = vector.shape_cast %85 : vector<8x128xf32> to vector<1x8x128xf32>
    tpu.vector_store %arg8[%c4_49, %c0_50, %c0_51], %88 {strides = array<i32>} : memref<5x8x128xf32, #tpu.memory_space<vmem>>, vector<1x8x128xf32>,
    return
  }
  func.func @transform_0(%arg0: i32, %arg1: memref<4xi32, #tpu.memory_space<smem>>, %arg2: memref<4xf32, #tpu.memory_space<smem>>, %arg3: memref<9xf32, #tpu.memory_space<smem>>, %arg4: memref<9xf32, #tpu.memory_space<smem>>) -> (i32, i32, i32) {
    %c0_i32 = arith.constant 0 : i32
    %c0_i32_0 = arith.constant 0 : i32
    %c0_i32_1 = arith.constant 0 : i32
    return %c0_i32, %arg0, %c0_i32_0 : i32, i32, i32
  }
  func.func @transform_1(%arg0: i32, %arg1: memref<4xi32, #tpu.memory_space<smem>>, %arg2: memref<4xf32, #tpu.memory_space<smem>>, %arg3: memref<9xf32, #tpu.memory_space<smem>>, %arg4: memref<9xf32, #tpu.memory_space<smem>>) -> (i32, i32, i32) {
    %c0_i32 = arith.constant 0 : i32
    %c0_i32_0 = arith.constant 0 : i32
    %c0_i32_1 = arith.constant 0 : i32
    return %c0_i32, %arg0, %c0_i32_0 : i32, i32, i32
  }
  func.func @transform_2(%arg0: i32, %arg1: memref<4xi32, #tpu.memory_space<smem>>, %arg2: memref<4xf32, #tpu.memory_space<smem>>, %arg3: memref<9xf32, #tpu.memory_space<smem>>, %arg4: memref<9xf32, #tpu.memory_space<smem>>) -> (i32, i32, i32) {
    %c0_i32 = arith.constant 0 : i32
    %c0_i32_0 = arith.constant 0 : i32
    %c0_i32_1 = arith.constant 0 : i32
    return %c0_i32, %arg0, %c0_i32_0 : i32, i32, i32
  }
  func.func @transform_3(%arg0: i32, %arg1: memref<4xi32, #tpu.memory_space<smem>>, %arg2: memref<4xf32, #tpu.memory_space<smem>>, %arg3: memref<9xf32, #tpu.memory_space<smem>>, %arg4: memref<9xf32, #tpu.memory_space<smem>>) -> (i32, i32, i32) {
    %c0_i32 = arith.constant 0 : i32
    %c0_i32_0 = arith.constant 0 : i32
    %c0_i32_1 = arith.constant 0 : i32
    return %c0_i32, %arg0, %c0_i32_0 : i32, i32, i32
  }
  func.func @transform_4(%arg0: i32, %arg1: memref<4xi32, #tpu.memory_space<smem>>, %arg2: memref<4xf32, #tpu.memory_space<smem>>, %arg3: memref<9xf32, #tpu.memory_space<smem>>, %arg4: memref<9xf32, #tpu.memory_space<smem>>) -> (i32, i32) {
    %c0_i32 = arith.constant 0 : i32
    %c0_i32_0 = arith.constant 0 : i32
    return %arg0, %c0_i32 : i32, i32
  }
  func.func @transform_5(%arg0: i32, %arg1: memref<4xi32, #tpu.memory_space<smem>>, %arg2: memref<4xf32, #tpu.memory_space<smem>>, %arg3: memref<9xf32, #tpu.memory_space<smem>>, %arg4: memref<9xf32, #tpu.memory_space<smem>>) -> (i32, i32) {
    %c0_i32 = arith.constant 0 : i32
    %c0_i32_0 = arith.constant 0 : i32
    return %arg0, %c0_i32 : i32, i32
  }
}

</mosaic_0001>

<llo_original>
// kernel: tpu_custom_call.1
$region0: #{tpu_custom_call.1}
  #allocation0 [shape = 'u32[]', space=smem, size = 0x4, offset = 0x4, fixed_abs, tag = 'smem constant byte address 0x4 - core index']
  #allocation1 [shape = 'u32[144,128]{1,0:T(1,128)}', space=vmem, size = 0x12000, scoped, tag = 'internal scratch']
  #allocation2 [shape = 's32[1]{0}', space=sflag, size = 0x4, scoped, tag = 'scoped memory for tpu_custom_call.1']
  #allocation3 [shape = 'u8[512]{0}', space=smem, size = 0x200, scoped, tag = 'prefetched SMEM operand 0']
  #allocation4 [shape = 'u8[512]{0}', space=smem, size = 0x200, scoped, tag = 'prefetched SMEM operand 1']
  #allocation5 [shape = 'u8[512]{0}', space=smem, size = 0x200, scoped, tag = 'prefetched SMEM operand 2']
  #allocation6 [shape = 'u8[512]{0}', space=smem, size = 0x200, scoped, tag = 'prefetched SMEM operand 3']
  %s0 = inlined_call_operand.hbm [shape: s32[4], index: 0, kind: input, shape index: {}]
  %s1 = inlined_call_operand.vmem [shape: f32[4], index: 1, kind: input, shape index: {}]
  %s2 = inlined_call_operand.vmem [shape: f32[9], index: 2, kind: input, shape index: {}]
  %s3 = inlined_call_operand.vmem [shape: f32[9], index: 3, kind: input, shape index: {}]
  %s4 = inlined_call_operand.hbm [shape: f32[5,16,128], index: 4, kind: input, shape index: {}]
  %s5 = inlined_call_operand.hbm [shape: f32[2,16,128], index: 5, kind: input, shape index: {}]
  %s6 = inlined_call_operand.hbm [shape: f32[2,16,128], index: 6, kind: input, shape index: {}]
  %s7 = inlined_call_operand.hbm [shape: f32[5,16,128], index: 7, kind: output, shape index: {0}]
  %s8 = inlined_call_operand.hbm [shape: f32[16,128], index: 8, kind: output, shape index: {1}]
  %s9 = inlined_call_operand.hbm [shape: s32[16,128], index: 9, kind: output, shape index: {2}]
  %10 = xla_tuple %s7, %s8, %s9
  %s11 = sld [smem:[#allocation0]]
  $region73: #{tpu_custom_call.1} parent=0
    _
  %s13 = ssub.s32 1, %s11
  %s14 = scalar_select 0, %s13, %s11
  %16 = dma.hbm_to_smem %s0, 16, [#allocation3], [#allocation2]
  %s17 = sshll.u32 %s1, 4
  %s18 = int_to_ptr.vmem [resolvable:$true] %s17
  %20 = dma.vmem_to_smem %s18, 16, [#allocation4], [#allocation2]
  %s21 = sshll.u32 %s2, 4
  %s22 = int_to_ptr.vmem [resolvable:$true] %s21
  %24 = dma.vmem_to_smem %s22, 16, [#allocation5], [#allocation2]
  %s25 = sshll.u32 %s3, 4
  %s26 = int_to_ptr.vmem [resolvable:$true] %s25
  %28 = dma.vmem_to_smem %s26, 16, [#allocation6], [#allocation2]
  %29 = dma.done [#allocation2], 64
  %30 = sfence
  $region1: #{tpu_custom_call.1} parent=0
    #allocation7 [shape = 'u8[40960]{0}', space=vmem, size = 0xa000, scoped, tag = 'input window, operand 4']
    #allocation8 [shape = 's32[2]{0}', space=sflag, size = 0x8, scoped, tag = 'scoped memory for tpu_custom_call.1']
    #allocation9 [shape = 's32[2]{0}', space=sflag, size = 0x8, scoped, tag = 'scoped memory for tpu_custom_call.1']
    #allocation10 [shape = 'u8[16384]{0}', space=vmem, size = 0x4000, scoped, tag = 'input window, operand 5']
    #allocation11 [shape = 's32[2]{0}', space=sflag, size = 0x8, scoped, tag = 'scoped memory for tpu_custom_call.1']
    #allocation12 [shape = 'u8[16384]{0}', space=vmem, size = 0x4000, scoped, tag = 'input window, operand 6']
    #allocation13 [shape = 'u8[40960]{0}', space=vmem, size = 0xa000, scoped, tag = 'output window, operand 0']
    #allocation14 [shape = 'u8[8192]{0}', space=vmem, size = 0x2000, scoped, tag = 'output window, operand 1']
    #allocation15 [shape = 's32[2]{0}', space=sflag, size = 0x8, scoped, tag = 'scoped memory for tpu_custom_call.1']
    #allocation16 [shape = 'u8[8192]{0}', space=vmem, size = 0x2000, scoped, tag = 'output window, operand 2']
    %31 = vsyncpa [#allocation8], 0
    %s32 = scalar_lea.sflag [#allocation8], 1
    %33 = vsyncpa %s32, 0
    %34 = vsyncpa [#allocation11], 0
    %s35 = scalar_lea.sflag [#allocation11], 1
    %36 = vsyncpa %s35, 0
    %37 = vsyncpa [#allocation9], 0
    %s38 = scalar_lea.sflag [#allocation9], 1
    %39 = vsyncpa %s38, 0
    %40 = vsyncpa [#allocation15], 0
    %s41 = scalar_lea.sflag [#allocation15], 1
    %42 = vsyncpa %s41, 0
    loop: start=0, step=1, limit=4
    $region2: #{tpu_custom_call.1} parent=1 // loop_pre_header
      _
    $region3: #{tpu_custom_call.1} parent=1 // loop_header
      %s44 = sphi 0, %s48
      %p45 = scmp.ge.s32.totalorder %s44, 4
      %s54 = sphi 0, %s56
      %s57 = sphi 0, %s54
      %s58 = sphi 0, %s57
      %s74 = sphi 0, %s58
      %s80 = sphi 0, %s82
      %s83 = sphi 0, %s80
      %s84 = sphi 0, %s83
      %s100 = sphi 0, %s84
      %s106 = sphi 0, %s108
      %s109 = sphi 0, %s106
      %s110 = sphi 0, %s109
      %s126 = sphi 0, %s110
      %s132 = sphi 0, %s134
      %s135 = sphi 0, %s132
      %s136 = sphi 0, %s135
      %s152 = sphi 0, %s136
      %s158 = sphi 0, %s160
      %s161 = sphi 0, %s158
      %s162 = sphi 0, %s161
      %s178 = sphi 0, %s162
      %s184 = sphi 0, %s186
      %s187 = sphi 0, %s184
      %s188 = sphi 0, %s187
      %s204 = sphi 0, %s188
    $region4: #{tpu_custom_call.1} parent=1 // loop_header_branch
      %47 = sbr.rel (%p45) target = $region8
    $region5: #{tpu_custom_call.1} parent=1 // loop_body
      %s49 = ssub.s32 %s44, 1
      %s50 = ssub.s32 %s44, 2
      %s51 = sadd.s32 %s44, 1
      %s52 = ssub.s32 %s44, %s51
      %p53 = scmp.eq.s32.totalorder %s52, 0
      %s55 = sadd.s32 %s54, 1
      %s56 = scalar_select %p53, %s54, %s55
      %p59 = pneg %p53
      %p60 = scmp.eq.s32.totalorder %s44, 1
      %p61 = por %p59, %p60
      %p62 = scmp.ne.s32.totalorder %s54, %s57
      %p63 = scmp.eq.s32.totalorder %s44, 0
      %p64 = por %p62, %p63
      %p65 = scmp.ne.s32.totalorder %s54, %s57
      %p66 = scmp.eq.s32.totalorder %s49, 1
      %p67 = por %p65, %p66
      %p68 = scmp.ne.s32.totalorder %s57, %s58
      %p69 = scmp.eq.s32.totalorder %s49, 0
      %p70 = por %p68, %p69
      %p71 = scmp.ne.s32.totalorder %s57, %s58
      %p72 = scmp.eq.s32.totalorder %s50, 1
      %p73 = por %p71, %p72
      %p75 = scmp.ne.s32.totalorder %s58, %s74
      %p76 = scmp.eq.s32.totalorder %s50, 0
      %p77 = por %p75, %p76
      %s78 = ssub.s32 %s44, %s51
      %p79 = scmp.eq.s32.totalorder %s78, 0
      %s81 = sadd.s32 %s80, 1
      %s82 = scalar_select %p79, %s80, %s81
      %p85 = pneg %p79
      %p86 = scmp.eq.s32.totalorder %s44, 1
      %p87 = por %p85, %p86
      %p88 = scmp.ne.s32.totalorder %s80, %s83
      %p89 = scmp.eq.s32.totalorder %s44, 0
      %p90 = por %p88, %p89
      %p91 = scmp.ne.s32.totalorder %s80, %s83
      %p92 = scmp.eq.s32.totalorder %s49, 1
      %p93 = por %p91, %p92
      %p94 = scmp.ne.s32.totalorder %s83, %s84
      %p95 = scmp.eq.s32.totalorder %s49, 0
      %p96 = por %p94, %p95
      %p97 = scmp.ne.s32.totalorder %s83, %s84
      %p98 = scmp.eq.s32.totalorder %s50, 1
      %p99 = por %p97, %p98
      %p101 = scmp.ne.s32.totalorder %s84, %s100
      %p102 = scmp.eq.s32.totalorder %s50, 0
      %p103 = por %p101, %p102
      %s104 = ssub.s32 %s44, %s51
      %p105 = scmp.eq.s32.totalorder %s104, 0
      %s107 = sadd.s32 %s106, 1
      %s108 = scalar_select %p105, %s106, %s107
      %p111 = pneg %p105
      %p112 = scmp.eq.s32.totalorder %s44, 1
      %p113 = por %p111, %p112
      %p114 = scmp.ne.s32.totalorder %s106, %s109
      %p115 = scmp.eq.s32.totalorder %s44, 0
      %p116 = por %p114, %p115
      %p117 = scmp.ne.s32.totalorder %s106, %s109
      %p118 = scmp.eq.s32.totalorder %s49, 1
      %p119 = por %p117, %p118
      %p120 = scmp.ne.s32.totalorder %s109, %s110
      %p121 = scmp.eq.s32.totalorder %s49, 0
      %p122 = por %p120, %p121
      %p123 = scmp.ne.s32.totalorder %s109, %s110
      %p124 = scmp.eq.s32.totalorder %s50, 1
      %p125 = por %p123, %p124
      %p127 = scmp.ne.s32.totalorder %s110, %s126
      %p128 = scmp.eq.s32.totalorder %s50, 0
      %p129 = por %p127, %p128
      %s130 = ssub.s32 %s44, %s51
      %p131 = scmp.eq.s32.totalorder %s130, 0
      %s133 = sadd.s32 %s132, 1
      %s134 = scalar_select %p131, %s132, %s133
      %p137 = pneg %p131
      %p138 = scmp.eq.s32.totalorder %s44, 1
      %p139 = por %p137, %p138
      %p140 = scmp.ne.s32.totalorder %s132, %s135
      %p141 = scmp.eq.s32.totalorder %s44, 0
      %p142 = por %p140, %p141
      %p143 = scmp.ne.s32.totalorder %s132, %s135
      %p144 = scmp.eq.s32.totalorder %s49, 1
      %p145 = por %p143, %p144
      %p146 = scmp.ne.s32.totalorder %s135, %s136
      %p147 = scmp.eq.s32.totalorder %s49, 0
      %p148 = por %p146, %p147
      %p149 = scmp.ne.s32.totalorder %s135, %s136
      %p150 = scmp.eq.s32.totalorder %s50, 1
      %p151 = por %p149, %p150
      %p153 = scmp.ne.s32.totalorder %s136, %s152
      %p154 = scmp.eq.s32.totalorder %s50, 0
      %p155 = por %p153, %p154
      %s156 = ssub.s32 %s44, %s51
      %p157 = scmp.eq.s32.totalorder %s156, 0
      %s159 = sadd.s32 %s158, 1
      %s160 = scalar_select %p157, %s158, %s159
      %p163 = pneg %p157
      %p164 = scmp.eq.s32.totalorder %s44, 1
      %p165 = por %p163, %p164
      %p166 = scmp.ne.s32.totalorder %s158, %s161
      %p167 = scmp.eq.s32.totalorder %s44, 0
      %p168 = por %p166, %p167
      %p169 = scmp.ne.s32.totalorder %s158, %s161
      %p170 = scmp.eq.s32.totalorder %s49, 1
      %p171 = por %p169, %p170
      %p172 = scmp.ne.s32.totalorder %s161, %s162
      %p173 = scmp.eq.s32.totalorder %s49, 0
      %p174 = por %p172, %p173
      %p175 = scmp.ne.s32.totalorder %s161, %s162
      %p176 = scmp.eq.s32.totalorder %s50, 1
      %p177 = por %p175, %p176
      %p179 = scmp.ne.s32.totalorder %s162, %s178
      %p180 = scmp.eq.s32.totalorder %s50, 0
      %p181 = por %p179, %p180
      %s182 = ssub.s32 %s44, %s51
      %p183 = scmp.eq.s32.totalorder %s182, 0
      %s185 = sadd.s32 %s184, 1
      %s186 = scalar_select %p183, %s184, %s185
      %p189 = pneg %p183
      %p190 = scmp.eq.s32.totalorder %s44, 1
      %p191 = por %p189, %p190
      %p192 = scmp.ne.s32.totalorder %s184, %s187
      %p193 = scmp.eq.s32.totalorder %s44, 0
      %p194 = por %p192, %p193
      %p195 = scmp.ne.s32.totalorder %s184, %s187
      %p196 = scmp.eq.s32.totalorder %s49, 1
      %p197 = por %p195, %p196
      %p198 = scmp.ne.s32.totalorder %s187, %s188
      %p199 = scmp.eq.s32.totalorder %s49, 0
      %p200 = por %p198, %p199
      %p201 = scmp.ne.s32.totalorder %s187, %s188
      %p202 = scmp.eq.s32.totalorder %s50, 1
      %p203 = por %p201, %p202
      %p205 = scmp.ne.s32.totalorder %s188, %s204
      %p206 = scmp.eq.s32.totalorder %s50, 0
      %p207 = por %p205, %p206
      %p208 = scmp.le.s32.totalorder 1, %s44
      %p209 = scmp.lt.s32.totalorder %s44, 3
      %p210 = pnand %p208, %p209
      %p211 = pneg %p210
      // Predicated region
      $region9: #{tpu_custom_call.1} parent=5 // pred_check
        _
      $region10: #{tpu_custom_call.1} parent=5 // pred_check_branch
        %213 = sbr.rel (%p210) target = $region12
      $region11: #{tpu_custom_call.1} parent=5 // pred_region
        %s214 = ssub.s32 %s44, 1
      $region12: #{tpu_custom_call.1} parent=5 // pred_fallthru
        _
      %p215 = scmp.lt.s32.totalorder %s44, 2
      // Predicated region
      $region13: #{tpu_custom_call.1} parent=5 // pred_check
        %p216 = pneg %p215
      $region14: #{tpu_custom_call.1} parent=5 // pred_check_branch
        %218 = sbr.rel (%p216) target = $region16
      $region15: #{tpu_custom_call.1} parent=5 // pred_region
        // Predicated region
        $region17: #{tpu_custom_call.1} parent=15 // pred_check
          %p219 = pneg %p64
        $region18: #{tpu_custom_call.1} parent=15 // pred_check_branch
          %221 = sbr.rel (%p219) target = $region20
        $region19: #{tpu_custom_call.1} parent=15 // pred_region
          %s222 = sand.u32 %s54, 1
          %s223 = scalar_lea.sflag [#allocation8], %s222
          %s224 = sand.u32 %s54, 1
          %s225 = smul.addr %s224, 40
          %s226 = scalar_lea.vmem [#allocation7], %s225
          %s228 = ssub.s32 640, 640
          %229 = vsyncadd %s223, %s228
          %s230 = smul.addr %s44, 128
          %s231 = scalar_lea.hbm %s4, %s230
          %s232 = sshll.u32 %s226, 4
          %s233 = int_to_ptr.vmem [resolvable:$true] %s232
          %238 = dma.hbm_to_vmem [thread:$0]  %s231, 640, %s233, %s223, 256, 128, 8
        $region20: #{tpu_custom_call.1} parent=15 // pred_fallthru
          _
        // Predicated region
        $region21: #{tpu_custom_call.1} parent=15 // pred_check
          %p239 = pneg %p90
        $region22: #{tpu_custom_call.1} parent=15 // pred_check_branch
          %241 = sbr.rel (%p239) target = $region24
        $region23: #{tpu_custom_call.1} parent=15 // pred_region
          %s242 = sand.u32 %s44, 1
          %s243 = scalar_lea.sflag [#allocation11], %s242
          %s244 = sand.u32 %s80, 1
          %s245 = smul.addr %s244, 16
          %s246 = scalar_lea.vmem [#allocation10], %s245
          %s248 = ssub.s32 256, 256
          %249 = vsyncadd %s243, %s248
          %s250 = smul.addr %s44, 128
          %s251 = scalar_lea.hbm %s5, %s250
          %s252 = sshll.u32 %s246, 4
          %s253 = int_to_ptr.vmem [resolvable:$true] %s252
          %258 = dma.hbm_to_vmem [thread:$0]  %s251, 256, %s253, %s243, 256, 128, 8
        $region24: #{tpu_custom_call.1} parent=15 // pred_fallthru
          _
        // Predicated region
        $region25: #{tpu_custom_call.1} parent=15 // pred_check
          %p259 = pneg %p116
        $region26: #{tpu_custom_call.1} parent=15 // pred_check_branch
          %261 = sbr.rel (%p259) target = $region28
        $region27: #{tpu_custom_call.1} parent=15 // pred_region
          %s262 = sand.u32 %s44, 1
          %s263 = scalar_lea.sflag [#allocation11], %s262
          %s264 = sand.u32 %s106, 1
          %s265 = smul.addr %s264, 16
          %s266 = scalar_lea.vmem [#allocation12], %s265
          %s268 = ssub.s32 256, 256
          %269 = vsyncadd %s263, %s268
          %s270 = smul.addr %s44, 128
          %s271 = scalar_lea.hbm %s6, %s270
          %s272 = sshll.u32 %s266, 4
          %s273 = int_to_ptr.vmem [resolvable:$true] %s272
          %278 = dma.hbm_to_vmem [thread:$0]  %s271, 256, %s273, %s263, 256, 128, 8
        $region28: #{tpu_custom_call.1} parent=15 // pred_fallthru
          _
      $region16: #{tpu_custom_call.1} parent=5 // pred_fallthru
        _
      %p279 = scmp.le.s32.totalorder 1, %s44
      %p280 = scmp.lt.s32.totalorder %s44, 3
      %p281 = pnand %p279, %p280
      %p282 = pneg %p281
      // Predicated region
      $region29: #{tpu_custom_call.1} parent=5 // pred_check
        _
      $region30: #{tpu_custom_call.1} parent=5 // pred_check_branch
        %284 = sbr.rel (%p281) target = $region32
      $region31: #{tpu_custom_call.1} parent=5 // pred_region
        %s285 = ssub.s32 %s44, 1
        %s286 = sand.u32 %s57, 1
        %s287 = scalar_lea.sflag [#allocation8], %s286
        %s288 = sand.u32 %s57, 1
        %s289 = smul.addr %s288, 40
        %s290 = scalar_lea.vmem [#allocation7], %s289
        // Predicated region
        $region33: #{tpu_custom_call.1} parent=31 // pred_check
          %p291 = pneg %p70
        $region34: #{tpu_custom_call.1} parent=31 // pred_check_branch
          %293 = sbr.rel (%p291) target = $region36
        $region35: #{tpu_custom_call.1} parent=31 // pred_region
          %294 = dma.done %s287, 640
        $region36: #{tpu_custom_call.1} parent=31 // pred_fallthru
          _
        %s295 = sand.u32 %s49, 1
        %s296 = scalar_lea.sflag [#allocation11], %s295
        %s297 = sand.u32 %s83, 1
        %s298 = smul.addr %s297, 16
        %s299 = scalar_lea.vmem [#allocation10], %s298
        // Predicated region
        $region37: #{tpu_custom_call.1} parent=31 // pred_check
          %p300 = pneg %p96
        $region38: #{tpu_custom_call.1} parent=31 // pred_check_branch
          %302 = sbr.rel (%p300) target = $region40
        $region39: #{tpu_custom_call.1} parent=31 // pred_region
          %303 = dma.done %s296, 256
        $region40: #{tpu_custom_call.1} parent=31 // pred_fallthru
          _
        %s304 = sand.u32 %s49, 1
        %s305 = scalar_lea.sflag [#allocation11], %s304
        %s306 = sand.u32 %s109, 1
        %s307 = smul.addr %s306, 16
        %s308 = scalar_lea.vmem [#allocation12], %s307
        // Predicated region
        $region41: #{tpu_custom_call.1} parent=31 // pred_check
          %p309 = pneg %p122
        $region42: #{tpu_custom_call.1} parent=31 // pred_check_branch
          %311 = sbr.rel (%p309) target = $region44
        $region43: #{tpu_custom_call.1} parent=31 // pred_region
          %312 = dma.done %s305, 256
        $region44: #{tpu_custom_call.1} parent=31 // pred_fallthru
          _
        %s313 = sand.u32 %s57, 1
        %s314 = scalar_lea.sflag [#allocation8], %s313
        %s315 = sand.u32 %s57, 1
        %s316 = smul.addr %s315, 40
        %s317 = scalar_lea.vmem [#allocation7], %s316
        %p318 = pneg %p70
        %p319 = pneg %p67
        %s320 = sand.u32 %s49, 1
        %s321 = scalar_lea.sflag [#allocation11], %s320
        %s322 = sand.u32 %s83, 1
        %s323 = smul.addr %s322, 16
        %s324 = scalar_lea.vmem [#allocation10], %s323
        %p325 = pneg %p96
        %p326 = pneg %p93
        %s327 = sand.u32 %s49, 1
        %s328 = scalar_lea.sflag [#allocation11], %s327
        %s329 = sand.u32 %s109, 1
        %s330 = smul.addr %s329, 16
        %s331 = scalar_lea.vmem [#allocation12], %s330
        %p332 = pneg %p122
        %p333 = pneg %p119
        %p334 = pneg %p148
        %p335 = pneg %p145
        %s336 = sand.u32 %s135, 1
        %s337 = scalar_lea.sflag [#allocation9], %s336
        %s338 = sand.u32 %s135, 1
        %s339 = smul.addr %s338, 40
        %s340 = scalar_lea.vmem [#allocation13], %s339
        %p341 = pneg %p174
        %p342 = pneg %p171
        %s343 = sand.u32 %s49, 1
        %s344 = scalar_lea.sflag [#allocation15], %s343
        %s345 = sand.u32 %s161, 1
        %s346 = smul.addr %s345, 8
        %s347 = scalar_lea.vmem [#allocation14], %s346
        %p348 = pneg %p200
        %p349 = pneg %p197
        %s350 = sand.u32 %s49, 1
        %s351 = scalar_lea.sflag [#allocation15], %s350
        %s352 = sand.u32 %s187, 1
        %s353 = smul.addr %s352, 8
        %s354 = scalar_lea.vmem [#allocation16], %s353
        %s355 = sld [smem:[#allocation4]]
        %s356 = sld [smem:[#allocation4 + $0x1]]
        %s357 = sld [smem:[#allocation4 + $0x2]]
        %s358 = sld [smem:[#allocation4 + $0x3]]
        %s359 = sld [smem:[#allocation3]]
        %s360 = sld [smem:[#allocation3 + $0x1]]
        %s361 = sld [smem:[#allocation3 + $0x2]]
        %s362 = sld [smem:[#allocation3 + $0x3]]
        %v363 = vld [vmem:[%s290] sm:$0xff]
        %s364 = scalar_lea.vmem %s290, 8 [#allocation7]
        %v365 = vld [vmem:[%s364] sm:$0xff]
        %s366 = scalar_lea.vmem %s290, 16 [#allocation7]
        %v367 = vld [vmem:[%s366] sm:$0xff]
        %s368 = scalar_lea.vmem %s290, 24 [#allocation7]
        %v369 = vld [vmem:[%s368] sm:$0xff]
        %s370 = scalar_lea.vmem %s290, 32 [#allocation7]
        %v371 = vld [vmem:[%s370] sm:$0xff]
        %v372 = vld [vmem:[%s299] sm:$0xff]
        %s373 = scalar_lea.vmem %s299, 8 [#allocation10]
        %v374 = vld [vmem:[%s373] sm:$0xff]
        %v375 = vld [vmem:[%s308] sm:$0xff]
        %s376 = scalar_lea.vmem %s308, 8 [#allocation12]
        %v377 = vld [vmem:[%s376] sm:$0xff]
        %v378 = vsub.f32 %v363, %v375
        %v379 = vsub.f32 %v365, %v377
        %v380 = vmul.f32 %v378, %v378
        %v381 = vmul.f32 %v379, %v379
        %v382 = vadd.f32 %v380, %v381
        %v383 = vrsqrt.pop %v382
        %v384 = vmul.f32 %v382, %v383
        %vm385 = vcmp.eq.f32.partialorder %v382, inf
        %v386 = vsel %vm385, %v382, %v384
        %vm387 = vcmp.eq.f32.partialorder %v382, 0.0
        %v388 = vand.u32 %v382, 2147483648
        %v389 = vsel %vm387, %v388, %v386
        %390 = vst [vmem:[%s347] sm:$0xff] %v389
        %s391 = smul.f32 %s358, %s358
        %v392 = vstv %s391
        %vm393 = vcmp.lt.f32.partialorder %v382, %v392
        %v394 = vsel %vm393, 1, 0
        %395 = vst [vmem:[%s354] sm:$0xff] %v394
        %s396 = ssub.s32 %s359, %s360
        %p397 = scmp.eq.s32.totalorder %s362, 1
        %p398 = scmp.ge.s32.totalorder %s396, 0
        %p399 = scmp.lt.s32.totalorder %s396, %s361
        %p400 = pnand %p398, %p399
        %p401 = pneg %p400
        %p402 = pnand %p397, %p401
        %p403 = pneg %p402
        %s404 = ssub.s32 %s361, 1
        %p405 = scmp.gt.s32.totalorder %s396, 0
        %s406 = scalar_select %p405, %s396, 0
        %p407 = scmp.lt.s32.totalorder %s404, %s406
        %s408 = scalar_select %p407, %s404, %s406
        %s409 = sld [smem:[#allocation5 + %s408]]
        %s410 = scalar_select %p403, %s409, 0.0
        %s411 = sld [smem:[#allocation6 + %s408]]
        %s412 = scalar_select %p403, %s411, 0.0
        %v413 = vand.u32 2147483647, %v367
        %vm414 = vcmp.le.f32.partialorder %v413, 0.7853982
        %vm415 = vcmp.lt.s32.totalorder %v367, 0
        %v416 = vand.u32 %v367, 2139095040
        %v417 = vshrl.u32 %v416, 23
        %v418 = vsub.s32 %v417, 127
        %v419 = vand.u32 2147483647, %v367
        %v420 = vand.u32 %v419, 8388607
        %v421 = vor.u32 %v420, 8388608
        %v422 = vsub.s32 0, %v421
        %v423 = vadd.s32 %v418, 1
        %vm424 = vcmp.gt.s32.totalorder %v423, 0
        %v425 = vsel %vm424, %v423, 0
        %v426 = vshrl.u32 %v425, 5
        %v427 = vand.u32 %v425, 31
        %v428 = vsub.s32 32, %v427
        %v429 = vshrl.u32 683565275, %v428
        %v430 = vshll.u32 683565275, %v427
        %v431 = vshrl.u32 2475754826, %v428
        %v432 = vor.u32 %v430, %v431
        %v433 = vshll.u32 2475754826, %v427
        %v434 = vshrl.u32 2131351028, %v428
        %v435 = vor.u32 %v433, %v434
        %v436 = vshll.u32 2131351028, %v427
        %v437 = vshrl.u32 2102212464, %v428
        %v438 = vor.u32 %v436, %v437
        %v439 = vshll.u32 2102212464, %v427
        %v440 = vshrl.u32 920167782, %v428
        %v441 = vor.u32 %v439, %v440
        %v442 = vshll.u32 920167782, %v427
        %v443 = vshrl.u32 1326507024, %v428
        %v444 = vor.u32 %v442, %v443
        %vm445 = vcmp.lt.s32.totalorder %v426, 1
        %vm446 = vcmp.lt.s32.totalorder %v426, 2
        %vm447 = vcmp.lt.s32.totalorder %v426, 3
        %vm448 = vcmp.lt.s32.totalorder %v426, 4
        %v449 = vsel %vm445, %v429, %v432
        %v450 = vsel %vm448, %v438, 2102212464
        %v451 = vsel %vm447, %v435, %v450
        %v452 = vsel %vm446, %v449, %v451
        %v453 = vsel %vm445, %v432, %v435
        %v454 = vsel %vm448, %v441, 920167782
        %v455 = vsel %vm447, %v438, %v454
        %v456 = vsel %vm446, %v453, %v455
        %v457 = vsel %vm445, %v435, %v438
        %v458 = vsel %vm448, %v444, 1326507024
        %v459 = vsel %vm447, %v441, %v458
        %v460 = vsel %vm446, %v457, %v459
        %v461 = vshll.u32 %v421, 8
        %v462 = vmul.u32.u64.compose %v461, %v460
        %v463 = vextract.low.u32 %v462
        %v464 = vextract.high.u32 %v462
        %v465 = vmul.u32.u64.compose %v461, %v456
        %v466 = vextract.low.u32 %v465
        %v467 = vextract.high.u32 %v465
        %v468 = vmul.u32 %v461, %v452
        %v469 = vadd.s32 %v464, %v466
        %vm470 = vc.u32 %v464, %v466
        %v471 = vadd.s32 %v467, 1
        %v472 = vsel %vm470, %v471, %v467
        %v473 = vadd.s32 %v468, %v472
        %v474 = vadd.s32 %v473, 536870912
        %v475 = vshrl.u32 %v474, 30
        %v476 = vshll.u32 %v475, 30
        %v477 = vsub.s32 %v473, %v476
        %vm478 = vcmp.lt.s32.totalorder %v477, 0
        %v479 = vsub.s32 0, %v477
        %v480 = vsel %vm478, %v479, %v477
        %v481 = vclz %v480
        %v482 = vsub.s32 %v481, 2
        %vm483 = vcmp.gt.s32.totalorder 0, %v482
        %v484 = vsel %vm483, 0, %v482
        %v485 = vsub.s32 32, %v484
        %v486 = vshll.u32 %v477, %v484
        %v487 = vshrl.u32 %v469, %v485
        %v488 = vor.u32 %v486, %v487
        %v489 = vsub.s32 4294967266, %v484
        %v490 = vadd.s32 %v489, 127
        %v491 = vshll.u32 %v490, 23
        %v492 = vor.u32 4788187, %v491
        %v493 = vand.u32 2147483647, %v492
        %v495 = vcvt.s32.f32 %v488
        %v496 = vmul.f32 %v495, %v493
        %v497 = vxor.u32 %v496, 2147483648
        %v498 = vsel %vm415, %v497, %v496
        %v499 = vsub.s32 4, %v475
        %v500 = vsel %vm415, %v499, %v475
        %v501 = vsel %vm414, %v367, %v498
        %v502 = vsel %vm414, 0, %v500
        %v503 = vcosq.f32.pop %v501
        %v504 = vsinq.f32.pop %v501
        %vm505 = vweird.f32 %v367
        %v506 = vand.u32 %v502, 3
        %vm507 = vcmp.lt.s32.totalorder %v506, 2
        %vm508 = vcmp.eq.s32.totalorder %v506, 0
        %v509 = vxor.u32 %v504, 2147483648
        %v510 = vsel %vm508, %v503, %v509
        %vm511 = vcmp.eq.s32.totalorder %v506, 2
        %v512 = vxor.u32 %v503, 2147483648
        %v513 = vsel %vm511, %v512, %v504
        %v514 = vsel %vm507, %v510, %v513
        %v515 = vsel %vm505, nan, %v514
        %v516 = vmul.f32 %v369, %v515
        %v517 = vstv %s355
        %v518 = vmul.f32 %v516, %v517
        %v519 = vadd.f32 %v363, %v518
        %520 = vst [vmem:[%s340] sm:$0xff] %v519
        %v521 = vand.u32 2147483647, %v367
        %vm522 = vcmp.le.f32.partialorder %v521, 0.7853982
        %vm523 = vcmp.lt.s32.totalorder %v367, 0
        %v524 = vand.u32 %v367, 2139095040
        %v525 = vshrl.u32 %v524, 23
        %v526 = vsub.s32 %v525, 127
        %v527 = vand.u32 2147483647, %v367
        %v528 = vand.u32 %v527, 8388607
        %v529 = vor.u32 %v528, 8388608
        %v530 = vsub.s32 0, %v529
        %v531 = vadd.s32 %v526, 1
        %vm532 = vcmp.gt.s32.totalorder %v531, 0
        %v533 = vsel %vm532, %v531, 0
        %v534 = vshrl.u32 %v533, 5
        %v535 = vand.u32 %v533, 31
        %v536 = vsub.s32 32, %v535
        %v537 = vshrl.u32 683565275, %v536
        %v538 = vshll.u32 683565275, %v535
        %v539 = vshrl.u32 2475754826, %v536
        %v540 = vor.u32 %v538, %v539
        %v541 = vshll.u32 2475754826, %v535
        %v542 = vshrl.u32 2131351028, %v536
        %v543 = vor.u32 %v541, %v542
        %v544 = vshll.u32 2131351028, %v535
        %v545 = vshrl.u32 2102212464, %v536
        %v546 = vor.u32 %v544, %v545
        %v547 = vshll.u32 2102212464, %v535
        %v548 = vshrl.u32 920167782, %v536
        %v549 = vor.u32 %v547, %v548
        %v550 = vshll.u32 920167782, %v535
        %v551 = vshrl.u32 1326507024, %v536
        %v552 = vor.u32 %v550, %v551
        %vm553 = vcmp.lt.s32.totalorder %v534, 1
        %vm554 = vcmp.lt.s32.totalorder %v534, 2
        %vm555 = vcmp.lt.s32.totalorder %v534, 3
        %vm556 = vcmp.lt.s32.totalorder %v534, 4
        %v557 = vsel %vm553, %v537, %v540
        %v558 = vsel %vm556, %v546, 2102212464
        %v559 = vsel %vm555, %v543, %v558
        %v560 = vsel %vm554, %v557, %v559
        %v561 = vsel %vm553, %v540, %v543
        %v562 = vsel %vm556, %v549, 920167782
        %v563 = vsel %vm555, %v546, %v562
        %v564 = vsel %vm554, %v561, %v563
        %v565 = vsel %vm553, %v543, %v546
        %v566 = vsel %vm556, %v552, 1326507024
        %v567 = vsel %vm555, %v549, %v566
        %v568 = vsel %vm554, %v565, %v567
        %v569 = vshll.u32 %v529, 8
        %v570 = vmul.u32.u64.compose %v569, %v568
        %v571 = vextract.low.u32 %v570
        %v572 = vextract.high.u32 %v570
        %v573 = vmul.u32.u64.compose %v569, %v564
        %v574 = vextract.low.u32 %v573
        %v575 = vextract.high.u32 %v573
        %v576 = vmul.u32 %v569, %v560
        %v577 = vadd.s32 %v572, %v574
        %vm578 = vc.u32 %v572, %v574
        %v579 = vadd.s32 %v575, 1
        %v580 = vsel %vm578, %v579, %v575
        %v581 = vadd.s32 %v576, %v580
        %v582 = vadd.s32 %v581, 536870912
        %v583 = vshrl.u32 %v582, 30
        %v584 = vshll.u32 %v583, 30
        %v585 = vsub.s32 %v581, %v584
        %vm586 = vcmp.lt.s32.totalorder %v585, 0
        %v587 = vsub.s32 0, %v585
        %v588 = vsel %vm586, %v587, %v585
        %v589 = vclz %v588
        %v590 = vsub.s32 %v589, 2
        %vm591 = vcmp.gt.s32.totalorder 0, %v590
        %v592 = vsel %vm591, 0, %v590
        %v593 = vsub.s32 32, %v592
        %v594 = vshll.u32 %v585, %v592
        %v595 = vshrl.u32 %v577, %v593
        %v596 = vor.u32 %v594, %v595
        %v597 = vsub.s32 4294967266, %v592
        %v598 = vadd.s32 %v597, 127
        %v599 = vshll.u32 %v598, 23
        %v600 = vor.u32 4788187, %v599
        %v601 = vand.u32 2147483647, %v600
        %v603 = vcvt.s32.f32 %v596
        %v604 = vmul.f32 %v603, %v601
        %v605 = vxor.u32 %v604, 2147483648
        %v606 = vsel %vm523, %v605, %v604
        %v607 = vsub.s32 4, %v583
        %v608 = vsel %vm523, %v607, %v583
        %v609 = vsel %vm522, %v367, %v606
        %v610 = vsel %vm522, 0, %v608
        %v611 = vcosq.f32.pop %v609
        %v612 = vsinq.f32.pop %v609
        %vm613 = vweird.f32 %v367
        %v614 = vadd.s32 %v610, 3
        %v615 = vand.u32 %v614, 3
        %vm616 = vcmp.lt.s32.totalorder %v615, 2
        %vm617 = vcmp.eq.s32.totalorder %v615, 0
        %v618 = vxor.u32 %v612, 2147483648
        %v619 = vsel %vm617, %v611, %v618
        %vm620 = vcmp.eq.s32.totalorder %v615, 2
        %v621 = vxor.u32 %v611, 2147483648
        %v622 = vsel %vm620, %v621, %v612
        %v623 = vsel %vm616, %v619, %v622
        %v624 = vsel %vm613, nan, %v623
        %v625 = vmul.f32 %v369, %v624
        %v626 = vmul.f32 %v625, %v517
        %v627 = vadd.f32 %v365, %v626
        %s628 = scalar_lea.vmem %s340, 8 [#allocation13]
        %629 = vst [vmem:[%s628] sm:$0xff] %v627
        %v630 = vmul.f32 %v371, %v517
        %v631 = vadd.f32 %v367, %v630
        %s632 = scalar_lea.vmem %s340, 16 [#allocation13]
        %633 = vst [vmem:[%s632] sm:$0xff] %v631
        %v634 = vstv %s356
        %v635 = vmul.f32 %v634, %v372
        %v636 = vstv %s410
        %v637 = vadd.f32 %v635, %v636
        %s638 = scalar_lea.vmem %s340, 24 [#allocation13]
        %639 = vst [vmem:[%s638] sm:$0xff] %v637
        %v640 = vstv %s357
        %v641 = vmul.f32 %v640, %v374
        %v642 = vstv %s412
        %v643 = vadd.f32 %v641, %v642
        %s644 = scalar_lea.vmem %s340, 32 [#allocation13]
        %645 = vst [vmem:[%s644] sm:$0xff] %v643
        %s646 = sand.u32 %s135, 1
        %s647 = scalar_lea.sflag [#allocation9], %s646
        %s648 = sand.u32 %s135, 1
        %s649 = smul.addr %s648, 40
        %s650 = scalar_lea.vmem [#allocation13], %s649
        %s651 = sand.u32 %s49, 1
        %s652 = scalar_lea.sflag [#allocation15], %s651
        %s653 = sand.u32 %s161, 1
        %s654 = smul.addr %s653, 8
        %s655 = scalar_lea.vmem [#allocation14], %s654
        %s656 = sand.u32 %s49, 1
        %s657 = scalar_lea.sflag [#allocation15], %s656
        %s658 = sand.u32 %s187, 1
        %s659 = smul.addr %s658, 8
        %s660 = scalar_lea.vmem [#allocation16], %s659
        // Predicated region
        $region45: #{tpu_custom_call.1} parent=31 // pred_check
          %p661 = pneg %p145
        $region46: #{tpu_custom_call.1} parent=31 // pred_check_branch
          %663 = sbr.rel (%p661) target = $region48
        $region47: #{tpu_custom_call.1} parent=31 // pred_region
          %s665 = ssub.s32 640, 640
          %666 = vsyncadd %s647, %s665
          %s667 = smul.addr %s49, 128
          %s668 = scalar_lea.hbm %s7, %s667
          %s669 = sshll.u32 %s650, 4
          %s670 = int_to_ptr.vmem [resolvable:$true] %s669
          %675 = dma.vmem_to_hbm [thread:$0]  %s670, 640, %s668, %s647, 128, 256, 8
        $region48: #{tpu_custom_call.1} parent=31 // pred_fallthru
          _
        // Predicated region
        $region49: #{tpu_custom_call.1} parent=31 // pred_check
          %p676 = pneg %p171
        $region50: #{tpu_custom_call.1} parent=31 // pred_check_branch
          %678 = sbr.rel (%p676) target = $region52
        $region51: #{tpu_custom_call.1} parent=31 // pred_region
          %s680 = ssub.s32 128, 128
          %681 = vsyncadd %s652, %s680
          %s682 = smul.addr %s49, 128
          %s683 = scalar_lea.hbm %s8, %s682
          %s685 = sshll.u32 %s655, 4
          %s686 = int_to_ptr.vmem [resolvable:$true] %s685
          %688 = dma.vmem_to_hbm [thread:$0]  %s686, 128, %s683, %s652
        $region52: #{tpu_custom_call.1} parent=31 // pred_fallthru
          _
        // Predicated region
        $region53: #{tpu_custom_call.1} parent=31 // pred_check
          %p689 = pneg %p197
        $region54: #{tpu_custom_call.1} parent=31 // pred_check_branch
          %691 = sbr.rel (%p689) target = $region56
        $region55: #{tpu_custom_call.1} parent=31 // pred_region
          %s693 = ssub.s32 128, 128
          %694 = vsyncadd %s657, %s693
          %s695 = smul.addr %s49, 128
          %s696 = scalar_lea.hbm %s9, %s695
          %s698 = sshll.u32 %s660, 4
          %s699 = int_to_ptr.vmem [resolvable:$true] %s698
          %701 = dma.vmem_to_hbm [thread:$0]  %s699, 128, %s696, %s657
        $region56: #{tpu_custom_call.1} parent=31 // pred_fallthru
          _
      $region32: #{tpu_custom_call.1} parent=5 // pred_fallthru
        _
      %p702 = scmp.le.s32.totalorder 2, %s44
      // Predicated region
      $region57: #{tpu_custom_call.1} parent=5 // pred_check
        %p703 = pneg %p702
      $region58: #{tpu_custom_call.1} parent=5 // pred_check_branch
        %705 = sbr.rel (%p703) target = $region60
      $region59: #{tpu_custom_call.1} parent=5 // pred_region
        %s706 = ssub.s32 %s44, 2
        // Predicated region
        $region61: #{tpu_custom_call.1} parent=59 // pred_check
          %p707 = pneg %p151
        $region62: #{tpu_custom_call.1} parent=59 // pred_check_branch
          %709 = sbr.rel (%p707) target = $region64
        $region63: #{tpu_custom_call.1} parent=59 // pred_region
          %s710 = sand.u32 %s136, 1
          %s711 = scalar_lea.sflag [#allocation9], %s710
          %s712 = sand.u32 %s136, 1
          %s713 = smul.addr %s712, 40
          %s714 = scalar_lea.vmem [#allocation13], %s713
          %715 = dma.done %s711, 640
        $region64: #{tpu_custom_call.1} parent=59 // pred_fallthru
          _
        // Predicated region
        $region65: #{tpu_custom_call.1} parent=59 // pred_check
          %p716 = pneg %p177
        $region66: #{tpu_custom_call.1} parent=59 // pred_check_branch
          %718 = sbr.rel (%p716) target = $region68
        $region67: #{tpu_custom_call.1} parent=59 // pred_region
          %s719 = sand.u32 %s50, 1
          %s720 = scalar_lea.sflag [#allocation15], %s719
          %s721 = sand.u32 %s162, 1
          %s722 = smul.addr %s721, 8
          %s723 = scalar_lea.vmem [#allocation14], %s722
          %724 = dma.done %s720, 128
        $region68: #{tpu_custom_call.1} parent=59 // pred_fallthru
          _
        // Predicated region
        $region69: #{tpu_custom_call.1} parent=59 // pred_check
          %p725 = pneg %p203
        $region70: #{tpu_custom_call.1} parent=59 // pred_check_branch
          %727 = sbr.rel (%p725) target = $region72
        $region71: #{tpu_custom_call.1} parent=59 // pred_region
          %s728 = sand.u32 %s50, 1
          %s729 = scalar_lea.sflag [#allocation15], %s728
          %s730 = sand.u32 %s188, 1
          %s731 = smul.addr %s730, 8
          %s732 = scalar_lea.vmem [#allocation16], %s731
          %733 = dma.done %s729, 128
        $region72: #{tpu_custom_call.1} parent=59 // pred_fallthru
          _
      $region60: #{tpu_custom_call.1} parent=5 // pred_fallthru
        _
    $region6: #{tpu_custom_call.1} parent=1 // loop_footer
      %s48 = sadd.s32 1, %s44
    $region7: #{tpu_custom_call.1} parent=1 // loop_footer_branch
      %43 = sbr.rel target = $region3
    $region8: #{tpu_custom_call.1} parent=1 // loop_exit
      _
    %734 = vsyncpa [#allocation8], 1
    %s735 = scalar_lea.sflag [#allocation8], 1
    %736 = vsyncpa %s735, 1
    %737 = vsyncpa [#allocation11], 1
    %s738 = scalar_lea.sflag [#allocation11], 1
    %739 = vsyncpa %s738, 1
    %740 = vsyncpa [#allocation9], 1
    %s741 = scalar_lea.sflag [#allocation9], 1
    %742 = vsyncpa %s741, 1
    %743 = vsyncpa [#allocation15], 1
    %s744 = scalar_lea.sflag [#allocation15], 1
    %745 = vsyncpa %s744, 1

</llo_original>
